<compile_context>
chip_gen: v5e
topology: v5e:2x2
jax: 0.10.0
libtpu: 0.0.40
codegen_flags: <defaults>
</compile_context>

<pallas_src>
import functools

import jax
import jax.numpy as jnp
from jax.experimental import pallas as pl
from jax.experimental.pallas import tpu as pltpu


def cross_attention_kernel(sp_ref, fc_ref, p32_ref, p128_ref, out_ref, *,
                           heads: int, eps: float):
  """One batch element per grid step.

  Layout convention: the embedding axis E lives on sublanes (columns of shape
  (E, 1)); the spatial axis HW lives on lanes. Every broadcast is then a
  size-1-dim broadcast, every reduction a plain lane/sublane reduction, and the
  final (E, HW) output slab is lane-dense.
  """
  C, HW = sp_ref.shape[1], sp_ref.shape[2]
  fc_dim = fc_ref.shape[2]
  E = out_ref.shape[1]
  hd = E // heads

  sp = sp_ref[0]                       # (C, HW)  spatial map, HW on lanes
  fc = fc_ref[0]                       # (1, fc_dim)

  # ---- static slices out of the two packed weight slabs (see wrapper) ----
  wqT = p32_ref[2 * E:3 * E, 0:fc_dim]        # (E, fc_dim), 1/sqrt(head_dim) pre-folded

  def column(i):                              # i-th (E, 1) vector, lane 0 of pack32
    r = (3 + i) * E
    return p32_ref[r:r + E, 0:1]

  bq, bk, bv = column(0), column(1), column(2)      # bq is pre-scaled
  g1, be1 = column(3), column(4)
  b2, g2, be2 = column(5), column(6), column(7)

  w1 = p128_ref[0:E, :]                       # (E, 4E)  Linear(E, 4E) weight (in, out)
  w2T = p128_ref[E:2 * E, :]                  # (E, 4E)  Linear(4E, E) weight, transposed
  b1 = p128_ref[2 * E:2 * E + 1, :]           # (1, 4E)

  # ---- q projection (Linear(fc_dim, E)) as a column: VPU multiply + lane reduce ----
  q = jnp.sum(wqT * fc, axis=-1, keepdims=True) + bq            # (E, 1)

  # ---- fused k/v projection (two 1x1 convs) as rank-1 VPU FMAs over channels ----
  # kv[e, p] = sum_c [Wk; Wv]^T[e, c] * sp[c, p]   (K = C is tiny -> keep off the MXU)
  kv = p32_ref[0:2 * E, 0:1] * sp[0:1, :]                        # channel 0
  for c in range(1, C):
    kv = kv + p32_ref[0:2 * E, c:c + 1] * sp[c:c + 1, :]         # (2E, HW)
  k = kv[0:E, :] + bk                         # conv biases added right after the
  v = kv[E:2 * E, :] + bv                     # projection (no ones-channel fold)

  # ---- per-head attention: aligned sublane slices, VPU/XLU only ----
  o_parts = []
  for h in range(heads):
    r0 = h * hd
    q_h = q[r0:r0 + hd, :]                                       # (hd, 1)
    k_h = k[r0:r0 + hd, :]                                       # (hd, HW)
    v_h = v[r0:r0 + hd, :]                                       # (hd, HW)
    s = jnp.sum(q_h * k_h, axis=0, keepdims=True)                # (1, HW) scores
    s = s - jnp.max(s, axis=-1, keepdims=True)
    p = jnp.exp(s)                                               # unnormalized softmax
    den = jnp.sum(p, axis=-1, keepdims=True)                     # (1, 1)
    o = jnp.sum(p * v_h, axis=-1, keepdims=True)                 # (hd, 1)
    o_parts.append(o / den)          # deferred, exact normalization (hd elems/head)
  attn = jnp.concatenate(o_parts, axis=0)                        # (E, 1)

  # ---- LayerNorm 1 (stats in f32 over the E sublanes) ----
  mu = jnp.mean(attn, axis=0, keepdims=True)
  var = jnp.mean(jnp.square(attn - mu), axis=0, keepdims=True)
  x = (attn - mu) * jax.lax.rsqrt(var + eps) * g1 + be1          # (E, 1)

  # ---- FFN: Linear(E,4E) -> ReLU -> Linear(4E,E) + residual; VPU/XLU only ----
  h1 = jnp.sum(w1 * x, axis=0, keepdims=True) + b1               # (1, 4E)
  h1 = jnp.maximum(h1, 0.0)
  y = x + jnp.sum(w2T * h1, axis=-1, keepdims=True) + b2         # (E, 1)

  # ---- LayerNorm 2 ----
  mu2 = jnp.mean(y, axis=0, keepdims=True)
  var2 = jnp.mean(jnp.square(y - mu2), axis=0, keepdims=True)
  xf = (y - mu2) * jax.lax.rsqrt(var2 + eps) * g2 + be2          # (E, 1)

  # ---- in-kernel spatial expand (PyTorch .expand): lane-dense (E, HW) store ----
  out_ref[0] = jnp.broadcast_to(xf, (E, HW))


def cross_attention_2d(spatial, fc, params, heads=4):
  """Pallas implementation of CrossAttention2D.forward."""
  B, C, H, W = spatial.shape
  HW = H * W
  fc_dim = fc.shape[-1]
  E = params["wq"].shape[1]
  assert E % heads == 0
  scale = float((E // heads) ** -0.5)
  f32 = jnp.float32

  # NCHW -> (B, C, HW): contiguous reshape, HW stays on the (minor) lane axis.
  sp = spatial.reshape(B, C, HW).astype(f32)
  fc3 = fc.reshape(B, 1, fc_dim).astype(f32)

  def as_col(v):                        # (1, n) row parameter -> (n, 1) column
    return jnp.asarray(v, f32).reshape(-1, 1)

  def pad_lanes(m, width):
    m = jnp.asarray(m, f32)
    return jnp.pad(m, ((0, 0), (0, width - m.shape[1])))

  # pack32 (lane width = E):
  #   rows [0, 2E)   : [Wk; Wv] transposed 1x1-conv weights, lanes [0, C) real
  #   rows [2E, 3E)  : Wq^T * (1/sqrt(head_dim)), lanes [0, fc_dim) real
  #   rows [3E, 11E) : eight (E, 1) vectors in lane 0:
  #                    bq*scale, bk, bv, g1, be1, b2, g2, be2
  wkvT = jnp.concatenate([jnp.asarray(params["wk"], f32).T,
                          jnp.asarray(params["wv"], f32).T], axis=0)        # (2E, C)
  wqT = jnp.asarray(params["wq"], f32).T * scale                            # (E, fc_dim)
  cols = jnp.concatenate(
      [as_col(params["bq"]) * scale, as_col(params["bk"]), as_col(params["bv"]),
       as_col(params["g1"]), as_col(params["be1"]),
       as_col(params["b2"]), as_col(params["g2"]), as_col(params["be2"])],
      axis=0)                                                               # (8E, 1)
  pack32 = jnp.concatenate(
      [pad_lanes(wkvT, E), pad_lanes(wqT, E), pad_lanes(cols, E)], axis=0)  # (11E, E)

  # pack128 (lane width = 4E): w1 (E,4E), w2^T (E,4E), b1 (1,4E)
  pack128 = jnp.concatenate(
      [jnp.asarray(params["w1"], f32),
       jnp.asarray(params["w2"], f32).T,
       jnp.asarray(params["b1"], f32)], axis=0)                             # (2E+1, 4E)

  kernel = functools.partial(cross_attention_kernel, heads=heads, eps=1e-5)

  grid_spec = pltpu.PrefetchScalarGridSpec(
      num_scalar_prefetch=0,
      grid=(B,),                               # one batch element per step;
      in_specs=[                               # "parallel" -> 2 TCs on v7x.
          pl.BlockSpec((1, C, HW), lambda b: (b, 0, 0)),
          pl.BlockSpec((1, 1, fc_dim), lambda b: (b, 0, 0)),
          pl.BlockSpec(pack32.shape, lambda b: (0, 0)),    # constant block index ->
          pl.BlockSpec(pack128.shape, lambda b: (0, 0)),   #   weights DMA'd only once
      ],
      out_specs=pl.BlockSpec((1, E, HW), lambda b: (b, 0, 0)),
  )

  # Per-step working set is ~(2E + 3) * HW * 4B (<0.3 MiB here): far below the default
  # scoped-VMEM limit on v5e/v6e/v7x, so no vmem_limit override is needed.
  # TODO(synk): for large H*W (>~128^2, especially on v7x's 64 MiB VMEM) add an
  # HW-tiled grid axis with online-softmax (m/l/acc) accumulators.
  out = pl.pallas_call(
      kernel,
      out_shape=jax.ShapeDtypeStruct((B, E, HW), f32),
      grid_spec=grid_spec,
      compiler_params=pltpu.CompilerParams(
          dimension_semantics=("parallel",)),
  )(sp, fc3, pack32, pack128)

  # PyTorch: x.view(B, -1, 1, 1).expand(B, E, H, W). The expand already happened
  # in-kernel (lane-dense store); this reshape is a free bitcast.
  return out.reshape(B, E, H, W)


def reference(spatial, fc, params, heads=4):
  """Pure-JAX reference matching the PyTorch forward pass."""
  B, C, H, W = spatial.shape
  HW = H * W
  E = params["wq"].shape[1]
  hd = E // heads
  scale = hd ** -0.5
  sp = jnp.transpose(spatial, (0, 2, 3, 1)).reshape(B, HW, C)
  q = fc @ params["wq"] + params["bq"][0]            # (B, E)
  k = sp @ params["wk"] + params["bk"][0]            # (B, HW, E)
  v = sp @ params["wv"] + params["bv"][0]
  qh = q.reshape(B, heads, hd)
  kh = jnp.transpose(k.reshape(B, HW, heads, hd), (0, 2, 1, 3))
  vh = jnp.transpose(v.reshape(B, HW, heads, hd), (0, 2, 1, 3))
  s = jnp.einsum("bhd,bhpd->bhp", qh, kh) * scale
  a = jax.nn.softmax(s, axis=-1)
  o = jnp.einsum("bhp,bhpd->bhd", a, vh).reshape(B, E)

  def ln(x, g, b, eps=1e-5):
    mu = x.mean(-1, keepdims=True)
    var = ((x - mu) ** 2).mean(-1, keepdims=True)
    return (x - mu) / jnp.sqrt(var + eps) * g + b

  x = ln(o, params["g1"][0], params["be1"][0])
  ffo = jnp.maximum(x @ params["w1"] + params["b1"][0], 0.0) @ params["w2"] + params["b2"][0]
  x = ln(x + ffo, params["g2"][0], params["be2"][0])
  return jnp.broadcast_to(x[:, :, None, None], (B, E, H, W))


def make_params(key, fc_dim, spatial_ch, embed_dim):
  E = embed_dim
  ks = jax.random.split(key, 12)

  def init(k, shape, s=0.1):
    return jax.random.normal(k, shape, jnp.float32) * s

  # Linear/Conv weights are stored pre-transposed: (in_features, out_features).
  return dict(
      wq=init(ks[0], (fc_dim, E)), bq=init(ks[1], (1, E)),
      wk=init(ks[2], (spatial_ch, E)), bk=init(ks[3], (1, E)),
      wv=init(ks[4], (spatial_ch, E)), bv=init(ks[5], (1, E)),
      g1=jnp.ones((1, E), jnp.float32), be1=jnp.zeros((1, E), jnp.float32),
      w1=init(ks[6], (E, 4 * E)), b1=init(ks[7], (1, 4 * E)),
      w2=init(ks[8], (4 * E, E)), b2=init(ks[9], (1, E)),
      g2=1.0 + init(ks[10], (1, E)), be2=init(ks[11], (1, E)),
  )


if __name__ == "__main__":
  B, spatial_ch, H, W = 2, 4, 16, 16
  fc_dim, embed_dim, heads = 8, 32, 4

  key = jax.random.PRNGKey(0)
  k_sp, k_fc, k_p = jax.random.split(key, 3)
  spatial = jax.random.normal(k_sp, (B, spatial_ch, H, W), jnp.float32)
  fc = jax.random.normal(k_fc, (B, fc_dim), jnp.float32)
  params = make_params(k_p, fc_dim, spatial_ch, embed_dim)

  out = jax.block_until_ready(cross_attention_2d(spatial, fc, params, heads=heads))
  ref = jax.block_until_ready(reference(spatial, fc, params, heads=heads))

  assert out.shape == (B, embed_dim, H, W)
  assert bool(jnp.allclose(out, ref, atol=2e-3, rtol=2e-3)), "mismatch vs reference"
  print("KERNEL_OK")
</pallas_src>

<mosaic_0001>
module attributes {stable_mosaic.version = 11 : i64} {
  func.func @cross_attention_kernel(%arg0: i32, %arg1: memref<1x4x256xf32, #tpu.memory_space<vmem>>, %arg2: memref<1x1x8xf32, #tpu.memory_space<vmem>>, %arg3: memref<352x32xf32, #tpu.memory_space<vmem>>, %arg4: memref<65x128xf32, #tpu.memory_space<vmem>>, %arg5: memref<1x32x256xf32, #tpu.memory_space<vmem>>) attributes {dimension_semantics = [#tpu.dimension_semantics<parallel>], iteration_bounds = array<i64: 2>, scalar_prefetch = 0 : i64, scratch_operands = 0 : i64, tpu.core_type = #tpu.core_type<tc>, window_params = [{transform_indices = @transform_0, window_bounds = array<i64: 1, 4, 256>}, {transform_indices = @transform_1, window_bounds = array<i64: 1, 1, 8>}, {pipeline_mode = #tpu.pipeline_mode<synchronous>, transform_indices = @transform_2, window_bounds = array<i64: 352, 32>}, {pipeline_mode = #tpu.pipeline_mode<synchronous>, transform_indices = @transform_3, window_bounds = array<i64: 65, 128>}, {transform_indices = @transform_4, window_bounds = array<i64: 1, 32, 256>}]} {
    %c0 = arith.constant 0 : index
    %c0_0 = arith.constant 0 : index
    %c0_1 = arith.constant 0 : index
    %0 = vector.load %arg1[%c0, %c0_0, %c0_1] : memref<1x4x256xf32, #tpu.memory_space<vmem>>, vector<1x4x256xf32>
    %1 = vector.shape_cast %0 : vector<1x4x256xf32> to vector<4x256xf32>
    %c0_2 = arith.constant 0 : index
    %c0_3 = arith.constant 0 : index
    %c0_4 = arith.constant 0 : index
    %2 = vector.load %arg2[%c0_2, %c0_3, %c0_4] : memref<1x1x8xf32, #tpu.memory_space<vmem>>, vector<1x1x8xf32>
    %3 = vector.shape_cast %2 : vector<1x1x8xf32> to vector<1x8xf32>
    %c64 = arith.constant 64 : index
    %c0_5 = arith.constant 0 : index
    %4 = vector.load %arg3[%c64, %c0_5] : memref<352x32xf32, #tpu.memory_space<vmem>>, vector<32x8xf32>
    %c96 = arith.constant 96 : index
    %c0_6 = arith.constant 0 : index
    %5 = vector.load %arg3[%c96, %c0_6] : memref<352x32xf32, #tpu.memory_space<vmem>>, vector<32x1xf32>
    %c128 = arith.constant 128 : index
    %c0_7 = arith.constant 0 : index
    %6 = vector.load %arg3[%c128, %c0_7] : memref<352x32xf32, #tpu.memory_space<vmem>>, vector<32x1xf32>
    %c160 = arith.constant 160 : index
    %c0_8 = arith.constant 0 : index
    %7 = vector.load %arg3[%c160, %c0_8] : memref<352x32xf32, #tpu.memory_space<vmem>>, vector<32x1xf32>
    %c192 = arith.constant 192 : index
    %c0_9 = arith.constant 0 : index
    %8 = vector.load %arg3[%c192, %c0_9] : memref<352x32xf32, #tpu.memory_space<vmem>>, vector<32x1xf32>
    %c224 = arith.constant 224 : index
    %c0_10 = arith.constant 0 : index
    %9 = vector.load %arg3[%c224, %c0_10] : memref<352x32xf32, #tpu.memory_space<vmem>>, vector<32x1xf32>
    %c256 = arith.constant 256 : index
    %c0_11 = arith.constant 0 : index
    %10 = vector.load %arg3[%c256, %c0_11] : memref<352x32xf32, #tpu.memory_space<vmem>>, vector<32x1xf32>
    %c288 = arith.constant 288 : index
    %c0_12 = arith.constant 0 : index
    %11 = vector.load %arg3[%c288, %c0_12] : memref<352x32xf32, #tpu.memory_space<vmem>>, vector<32x1xf32>
    %c320 = arith.constant 320 : index
    %c0_13 = arith.constant 0 : index
    %12 = vector.load %arg3[%c320, %c0_13] : memref<352x32xf32, #tpu.memory_space<vmem>>, vector<32x1xf32>
    %c0_14 = arith.constant 0 : index
    %c0_15 = arith.constant 0 : index
    %13 = vector.load %arg4[%c0_14, %c0_15] : memref<65x128xf32, #tpu.memory_space<vmem>>, vector<32x128xf32>
    %c32 = arith.constant 32 : index
    %c0_16 = arith.constant 0 : index
    %14 = vector.load %arg4[%c32, %c0_16] : memref<65x128xf32, #tpu.memory_space<vmem>>, vector<32x128xf32>
    %c64_17 = arith.constant 64 : index
    %c0_18 = arith.constant 0 : index
    %15 = vector.load %arg4[%c64_17, %c0_18] : memref<65x128xf32, #tpu.memory_space<vmem>>, vector<1x128xf32>
    %16 = vector.broadcast %3 : vector<1x8xf32> to vector<32x8xf32>
    %17 = arith.mulf %4, %16 : vector<32x8xf32>
    %cst = arith.constant dense<0.000000e+00> : vector<32xf32>
    %18 = vector.multi_reduction <add>, %17, %cst [1] : vector<32x8xf32> to vector<32xf32>
    %19 = vector.shape_cast %18 : vector<32xf32> to vector<32x1xf32>
    %20 = arith.addf %19, %5 : vector<32x1xf32>
    %c0_19 = arith.constant 0 : index
    %c0_20 = arith.constant 0 : index
    %21 = vector.load %arg3[%c0_19, %c0_20] : memref<352x32xf32, #tpu.memory_space<vmem>>, vector<64x1xf32>
    %22 = vector.extract_strided_slice %1 {offsets = [0, 0], sizes = [1, 256], strides = [1, 1]} : vector<4x256xf32> to vector<1x256xf32>
    %23 = vector.broadcast %21 : vector<64x1xf32> to vector<64x256xf32>
    %24 = vector.broadcast %22 : vector<1x256xf32> to vector<64x256xf32>
    %25 = arith.mulf %23, %24 : vector<64x256xf32>
    %c0_21 = arith.constant 0 : index
    %c1 = arith.constant 1 : index
    %26 = vector.load %arg3[%c0_21, %c1] : memref<352x32xf32, #tpu.memory_space<vmem>>, vector<64x1xf32>
    %27 = vector.extract_strided_slice %1 {offsets = [1, 0], sizes = [1, 256], strides = [1, 1]} : vector<4x256xf32> to vector<1x256xf32>
    %28 = vector.broadcast %26 : vector<64x1xf32> to vector<64x256xf32>
    %29 = vector.broadcast %27 : vector<1x256xf32> to vector<64x256xf32>
    %30 = arith.mulf %28, %29 : vector<64x256xf32>
    %31 = arith.addf %25, %30 : vector<64x256xf32>
    %c0_22 = arith.constant 0 : index
    %c2 = arith.constant 2 : index
    %32 = vector.load %arg3[%c0_22, %c2] : memref<352x32xf32, #tpu.memory_space<vmem>>, vector<64x1xf32>
    %33 = vector.extract_strided_slice %1 {offsets = [2, 0], sizes = [1, 256], strides = [1, 1]} : vector<4x256xf32> to vector<1x256xf32>
    %34 = vector.broadcast %32 : vector<64x1xf32> to vector<64x256xf32>
    %35 = vector.broadcast %33 : vector<1x256xf32> to vector<64x256xf32>
    %36 = arith.mulf %34, %35 : vector<64x256xf32>
    %37 = arith.addf %31, %36 : vector<64x256xf32>
    %c0_23 = arith.constant 0 : index
    %c3 = arith.constant 3 : index
    %38 = vector.load %arg3[%c0_23, %c3] : memref<352x32xf32, #tpu.memory_space<vmem>>, vector<64x1xf32>
    %39 = vector.extract_strided_slice %1 {offsets = [3, 0], sizes = [1, 256], strides = [1, 1]} : vector<4x256xf32> to vector<1x256xf32>
    %40 = vector.broadcast %38 : vector<64x1xf32> to vector<64x256xf32>
    %41 = vector.broadcast %39 : vector<1x256xf32> to vector<64x256xf32>
    %42 = arith.mulf %40, %41 : vector<64x256xf32>
    %43 = arith.addf %37, %42 : vector<64x256xf32>
    %44 = vector.extract_strided_slice %43 {offsets = [0, 0], sizes = [32, 256], strides = [1, 1]} : vector<64x256xf32> to vector<32x256xf32>
    %45 = vector.broadcast %6 : vector<32x1xf32> to vector<32x256xf32>
    %46 = arith.addf %44, %45 : vector<32x256xf32>
    %47 = vector.extract_strided_slice %43 {offsets = [32, 0], sizes = [32, 256], strides = [1, 1]} : vector<64x256xf32> to vector<32x256xf32>
    %48 = vector.broadcast %7 : vector<32x1xf32> to vector<32x256xf32>
    %49 = arith.addf %47, %48 : vector<32x256xf32>
    %50 = vector.extract_strided_slice %20 {offsets = [0, 0], sizes = [8, 1], strides = [1, 1]} : vector<32x1xf32> to vector<8x1xf32>
    %51 = vector.extract_strided_slice %46 {offsets = [0, 0], sizes = [8, 256], strides = [1, 1]} : vector<32x256xf32> to vector<8x256xf32>
    %52 = vector.extract_strided_slice %49 {offsets = [0, 0], sizes = [8, 256], strides = [1, 1]} : vector<32x256xf32> to vector<8x256xf32>
    %53 = vector.broadcast %50 : vector<8x1xf32> to vector<8x256xf32>
    %54 = arith.mulf %53, %51 : vector<8x256xf32>
    %cst_24 = arith.constant dense<0.000000e+00> : vector<256xf32>
    %55 = vector.multi_reduction <add>, %54, %cst_24 [0] : vector<8x256xf32> to vector<256xf32>
    %56 = vector.shape_cast %55 : vector<256xf32> to vector<1x256xf32>
    %cst_25 = arith.constant dense<0xFF800000> : vector<1xf32>
    %57 = vector.multi_reduction <maximumf>, %56, %cst_25 [1] : vector<1x256xf32> to vector<1xf32>
    %58 = vector.shape_cast %57 : vector<1xf32> to vector<1x1xf32>
    %59 = vector.broadcast %58 : vector<1x1xf32> to vector<1x256xf32>
    %60 = arith.subf %56, %59 : vector<1x256xf32>
    %61 = math.exp %60 : vector<1x256xf32>
    %cst_26 = arith.constant dense<0.000000e+00> : vector<1xf32>
    %62 = vector.multi_reduction <add>, %61, %cst_26 [1] : vector<1x256xf32> to vector<1xf32>
    %63 = vector.shape_cast %62 : vector<1xf32> to vector<1x1xf32>
    %64 = vector.broadcast %61 : vector<1x256xf32> to vector<8x256xf32>
    %65 = arith.mulf %64, %52 : vector<8x256xf32>
    %cst_27 = arith.constant dense<0.000000e+00> : vector<8xf32>
    %66 = vector.multi_reduction <add>, %65, %cst_27 [1] : vector<8x256xf32> to vector<8xf32>
    %67 = vector.shape_cast %66 : vector<8xf32> to vector<8x1xf32>
    %68 = vector.broadcast %63 : vector<1x1xf32> to vector<8x1xf32>
    %69 = arith.divf %67, %68 : vector<8x1xf32>
    %70 = vector.extract_strided_slice %20 {offsets = [8, 0], sizes = [8, 1], strides = [1, 1]} : vector<32x1xf32> to vector<8x1xf32>
    %71 = vector.extract_strided_slice %46 {offsets = [8, 0], sizes = [8, 256], strides = [1, 1]} : vector<32x256xf32> to vector<8x256xf32>
    %72 = vector.extract_strided_slice %49 {offsets = [8, 0], sizes = [8, 256], strides = [1, 1]} : vector<32x256xf32> to vector<8x256xf32>
    %73 = vector.broadcast %70 : vector<8x1xf32> to vector<8x256xf32>
    %74 = arith.mulf %73, %71 : vector<8x256xf32>
    %cst_28 = arith.constant dense<0.000000e+00> : vector<256xf32>
    %75 = vector.multi_reduction <add>, %74, %cst_28 [0] : vector<8x256xf32> to vector<256xf32>
    %76 = vector.shape_cast %75 : vector<256xf32> to vector<1x256xf32>
    %cst_29 = arith.constant dense<0xFF800000> : vector<1xf32>
    %77 = vector.multi_reduction <maximumf>, %76, %cst_29 [1] : vector<1x256xf32> to vector<1xf32>
    %78 = vector.shape_cast %77 : vector<1xf32> to vector<1x1xf32>
    %79 = vector.broadcast %78 : vector<1x1xf32> to vector<1x256xf32>
    %80 = arith.subf %76, %79 : vector<1x256xf32>
    %81 = math.exp %80 : vector<1x256xf32>
    %cst_30 = arith.constant dense<0.000000e+00> : vector<1xf32>
    %82 = vector.multi_reduction <add>, %81, %cst_30 [1] : vector<1x256xf32> to vector<1xf32>
    %83 = vector.shape_cast %82 : vector<1xf32> to vector<1x1xf32>
    %84 = vector.broadcast %81 : vector<1x256xf32> to vector<8x256xf32>
    %85 = arith.mulf %84, %72 : vector<8x256xf32>
    %cst_31 = arith.constant dense<0.000000e+00> : vector<8xf32>
    %86 = vector.multi_reduction <add>, %85, %cst_31 [1] : vector<8x256xf32> to vector<8xf32>
    %87 = vector.shape_cast %86 : vector<8xf32> to vector<8x1xf32>
    %88 = vector.broadcast %83 : vector<1x1xf32> to vector<8x1xf32>
    %89 = arith.divf %87, %88 : vector<8x1xf32>
    %90 = vector.extract_strided_slice %20 {offsets = [16, 0], sizes = [8, 1], strides = [1, 1]} : vector<32x1xf32> to vector<8x1xf32>
    %91 = vector.extract_strided_slice %46 {offsets = [16, 0], sizes = [8, 256], strides = [1, 1]} : vector<32x256xf32> to vector<8x256xf32>
    %92 = vector.extract_strided_slice %49 {offsets = [16, 0], sizes = [8, 256], strides = [1, 1]} : vector<32x256xf32> to vector<8x256xf32>
    %93 = vector.broadcast %90 : vector<8x1xf32> to vector<8x256xf32>
    %94 = arith.mulf %93, %91 : vector<8x256xf32>
    %cst_32 = arith.constant dense<0.000000e+00> : vector<256xf32>
    %95 = vector.multi_reduction <add>, %94, %cst_32 [0] : vector<8x256xf32> to vector<256xf32>
    %96 = vector.shape_cast %95 : vector<256xf32> to vector<1x256xf32>
    %cst_33 = arith.constant dense<0xFF800000> : vector<1xf32>
    %97 = vector.multi_reduction <maximumf>, %96, %cst_33 [1] : vector<1x256xf32> to vector<1xf32>
    %98 = vector.shape_cast %97 : vector<1xf32> to vector<1x1xf32>
    %99 = vector.broadcast %98 : vector<1x1xf32> to vector<1x256xf32>
    %100 = arith.subf %96, %99 : vector<1x256xf32>
    %101 = math.exp %100 : vector<1x256xf32>
    %cst_34 = arith.constant dense<0.000000e+00> : vector<1xf32>
    %102 = vector.multi_reduction <add>, %101, %cst_34 [1] : vector<1x256xf32> to vector<1xf32>
    %103 = vector.shape_cast %102 : vector<1xf32> to vector<1x1xf32>
    %104 = vector.broadcast %101 : vector<1x256xf32> to vector<8x256xf32>
    %105 = arith.mulf %104, %92 : vector<8x256xf32>
    %cst_35 = arith.constant dense<0.000000e+00> : vector<8xf32>
    %106 = vector.multi_reduction <add>, %105, %cst_35 [1] : vector<8x256xf32> to vector<8xf32>
    %107 = vector.shape_cast %106 : vector<8xf32> to vector<8x1xf32>
    %108 = vector.broadcast %103 : vector<1x1xf32> to vector<8x1xf32>
    %109 = arith.divf %107, %108 : vector<8x1xf32>
    %110 = vector.extract_strided_slice %20 {offsets = [24, 0], sizes = [8, 1], strides = [1, 1]} : vector<32x1xf32> to vector<8x1xf32>
    %111 = vector.extract_strided_slice %46 {offsets = [24, 0], sizes = [8, 256], strides = [1, 1]} : vector<32x256xf32> to vector<8x256xf32>
    %112 = vector.extract_strided_slice %49 {offsets = [24, 0], sizes = [8, 256], strides = [1, 1]} : vector<32x256xf32> to vector<8x256xf32>
    %113 = vector.broadcast %110 : vector<8x1xf32> to vector<8x256xf32>
    %114 = arith.mulf %113, %111 : vector<8x256xf32>
    %cst_36 = arith.constant dense<0.000000e+00> : vector<256xf32>
    %115 = vector.multi_reduction <add>, %114, %cst_36 [0] : vector<8x256xf32> to vector<256xf32>
    %116 = vector.shape_cast %115 : vector<256xf32> to vector<1x256xf32>
    %cst_37 = arith.constant dense<0xFF800000> : vector<1xf32>
    %117 = vector.multi_reduction <maximumf>, %116, %cst_37 [1] : vector<1x256xf32> to vector<1xf32>
    %118 = vector.shape_cast %117 : vector<1xf32> to vector<1x1xf32>
    %119 = vector.broadcast %118 : vector<1x1xf32> to vector<1x256xf32>
    %120 = arith.subf %116, %119 : vector<1x256xf32>
    %121 = math.exp %120 : vector<1x256xf32>
    %cst_38 = arith.constant dense<0.000000e+00> : vector<1xf32>
    %122 = vector.multi_reduction <add>, %121, %cst_38 [1] : vector<1x256xf32> to vector<1xf32>
    %123 = vector.shape_cast %122 : vector<1xf32> to vector<1x1xf32>
    %124 = vector.broadcast %121 : vector<1x256xf32> to vector<8x256xf32>
    %125 = arith.mulf %124, %112 : vector<8x256xf32>
    %cst_39 = arith.constant dense<0.000000e+00> : vector<8xf32>
    %126 = vector.multi_reduction <add>, %125, %cst_39 [1] : vector<8x256xf32> to vector<8xf32>
    %127 = vector.shape_cast %126 : vector<8xf32> to vector<8x1xf32>
    %128 = vector.broadcast %123 : vector<1x1xf32> to vector<8x1xf32>
    %129 = arith.divf %127, %128 : vector<8x1xf32>
    %130 = tpu.concatenate %69, %89, %109, %129 in 0 : vector<8x1xf32>, vector<8x1xf32>, vector<8x1xf32>, vector<8x1xf32> -> vector<32x1xf32>
    %cst_40 = arith.constant dense<0.000000e+00> : vector<1xf32>
    %131 = vector.multi_reduction <add>, %130, %cst_40 [0] : vector<32x1xf32> to vector<1xf32>
    %132 = vector.shape_cast %131 : vector<1xf32> to vector<1x1xf32>
    %cst_41 = arith.constant 3.200000e+01 : f32
    %133 = vector.broadcast %cst_41 : f32 to vector<1x1xf32>
    %134 = arith.divf %132, %133 : vector<1x1xf32>
    %135 = vector.broadcast %134 : vector<1x1xf32> to vector<32x1xf32>
    %136 = arith.subf %130, %135 : vector<32x1xf32>
    %137 = arith.mulf %136, %136 : vector<32x1xf32>
    %cst_42 = arith.constant dense<0.000000e+00> : vector<1xf32>
    %138 = vector.multi_reduction <add>, %137, %cst_42 [0] : vector<32x1xf32> to vector<1xf32>
    %139 = vector.shape_cast %138 : vector<1xf32> to vector<1x1xf32>
    %cst_43 = arith.constant 3.200000e+01 : f32
    %140 = vector.broadcast %cst_43 : f32 to vector<1x1xf32>
    %141 = arith.divf %139, %140 : vector<1x1xf32>
    %142 = vector.broadcast %134 : vector<1x1xf32> to vector<32x1xf32>
    %143 = arith.subf %130, %142 : vector<32x1xf32>
    %cst_44 = arith.constant 9.99999974E-6 : f32
    %144 = vector.broadcast %cst_44 : f32 to vector<1x1xf32>
    %145 = arith.addf %141, %144 : vector<1x1xf32>
    %146 = math.rsqrt %145 : vector<1x1xf32>
    %147 = vector.broadcast %146 : vector<1x1xf32> to vector<32x1xf32>
    %148 = arith.mulf %143, %147 : vector<32x1xf32>
    %149 = arith.mulf %148, %8 : vector<32x1xf32>
    %150 = arith.addf %149, %9 : vector<32x1xf32>
    %151 = vector.broadcast %150 : vector<32x1xf32> to vector<32x128xf32>
    %152 = arith.mulf %13, %151 : vector<32x128xf32>
    %cst_45 = arith.constant dense<0.000000e+00> : vector<128xf32>
    %153 = vector.multi_reduction <add>, %152, %cst_45 [0] : vector<32x128xf32> to vector<128xf32>
    %154 = vector.shape_cast %153 : vector<128xf32> to vector<1x128xf32>
    %155 = arith.addf %154, %15 : vector<1x128xf32>
    %cst_46 = arith.constant 0.000000e+00 : f32
    %156 = vector.broadcast %cst_46 : f32 to vector<1x128xf32>
    %157 = arith.maximumf %155, %156 : vector<1x128xf32>
    %158 = vector.broadcast %157 : vector<1x128xf32> to vector<32x128xf32>
    %159 = arith.mulf %14, %158 : vector<32x128xf32>
    %cst_47 = arith.constant dense<0.000000e+00> : vector<32xf32>
    %160 = vector.multi_reduction <add>, %159, %cst_47 [1] : vector<32x128xf32> to vector<32xf32>
    %161 = vector.shape_cast %160 : vector<32xf32> to vector<32x1xf32>
    %162 = arith.addf %150, %161 : vector<32x1xf32>
    %163 = arith.addf %162, %10 : vector<32x1xf32>
    %cst_48 = arith.constant dense<0.000000e+00> : vector<1xf32>
    %164 = vector.multi_reduction <add>, %163, %cst_48 [0] : vector<32x1xf32> to vector<1xf32>
    %165 = vector.shape_cast %164 : vector<1xf32> to vector<1x1xf32>
    %cst_49 = arith.constant 3.200000e+01 : f32
    %166 = vector.broadcast %cst_49 : f32 to vector<1x1xf32>
    %167 = arith.divf %165, %166 : vector<1x1xf32>
    %168 = vector.broadcast %167 : vector<1x1xf32> to vector<32x1xf32>
    %169 = arith.subf %163, %168 : vector<32x1xf32>
    %170 = arith.mulf %169, %169 : vector<32x1xf32>
    %cst_50 = arith.constant dense<0.000000e+00> : vector<1xf32>
    %171 = vector.multi_reduction <add>, %170, %cst_50 [0] : vector<32x1xf32> to vector<1xf32>
    %172 = vector.shape_cast %171 : vector<1xf32> to vector<1x1xf32>
    %cst_51 = arith.constant 3.200000e+01 : f32
    %173 = vector.broadcast %cst_51 : f32 to vector<1x1xf32>
    %174 = arith.divf %172, %173 : vector<1x1xf32>
    %175 = vector.broadcast %167 : vector<1x1xf32> to vector<32x1xf32>
    %176 = arith.subf %163, %175 : vector<32x1xf32>
    %cst_52 = arith.constant 9.99999974E-6 : f32
    %177 = vector.broadcast %cst_52 : f32 to vector<1x1xf32>
    %178 = arith.addf %174, %177 : vector<1x1xf32>
    %179 = math.rsqrt %178 : vector<1x1xf32>
    %180 = vector.broadcast %179 : vector<1x1xf32> to vector<32x1xf32>
    %181 = arith.mulf %176, %180 : vector<32x1xf32>
    %182 = arith.mulf %181, %11 : vector<32x1xf32>
    %183 = arith.addf %182, %12 : vector<32x1xf32>
    %184 = vector.shape_cast %183 : vector<32x1xf32> to vector<32x1xf32>
    %185 = vector.broadcast %184 : vector<32x1xf32> to vector<32x256xf32>
    %c0_53 = arith.constant 0 : index
    %c0_54 = arith.constant 0 : index
    %c0_55 = arith.constant 0 : index
    %186 = vector.load %arg5[%c0_53, %c0_54, %c0_55] : memref<1x32x256xf32, #tpu.memory_space<vmem>>, vector<1x32x256xf32>
    %187 = vector.shape_cast %186 : vector<1x32x256xf32> to vector<32x256xf32>
    %188 = vector.shape_cast %185 : vector<32x256xf32> to vector<1x32x256xf32>
    tpu.vector_store %arg5[%c0_53, %c0_54, %c0_55], %188 {strides = array<i32>} : memref<1x32x256xf32, #tpu.memory_space<vmem>>, vector<1x32x256xf32>,
    return
  }
  func.func @transform_0(%arg0: i32) -> (i32, i32, i32) {
    %c0_i32 = arith.constant 0 : i32
    %c0_i32_0 = arith.constant 0 : i32
    %c0_i32_1 = arith.constant 0 : i32
    return %arg0, %c0_i32, %c0_i32_0 : i32, i32, i32
  }
  func.func @transform_1(%arg0: i32) -> (i32, i32, i32) {
    %c0_i32 = arith.constant 0 : i32
    %c0_i32_0 = arith.constant 0 : i32
    %c0_i32_1 = arith.constant 0 : i32
    return %arg0, %c0_i32, %c0_i32_0 : i32, i32, i32
  }
  func.func @transform_2(%arg0: i32) -> (i32, i32) {
    %c0_i32 = arith.constant 0 : i32
    %c0_i32_0 = arith.constant 0 : i32
    %c0_i32_1 = arith.constant 0 : i32
    return %c0_i32, %c0_i32_0 : i32, i32
  }
  func.func @transform_3(%arg0: i32) -> (i32, i32) {
    %c0_i32 = arith.constant 0 : i32
    %c0_i32_0 = arith.constant 0 : i32
    %c0_i32_1 = arith.constant 0 : i32
    return %c0_i32, %c0_i32_0 : i32, i32
  }
  func.func @transform_4(%arg0: i32) -> (i32, i32, i32) {
    %c0_i32 = arith.constant 0 : i32
    %c0_i32_0 = arith.constant 0 : i32
    %c0_i32_1 = arith.constant 0 : i32
    return %arg0, %c0_i32, %c0_i32_0 : i32, i32, i32
  }
}

</mosaic_0001>

<llo_original>
// kernel: tpu_custom_call.1
$region0: #{tpu_custom_call.1}
  #allocation0 [shape = 'u32[]', space=smem, size = 0x4, offset = 0x4, fixed_abs, tag = 'smem constant byte address 0x4 - core index']
  #allocation1 [shape = 'u32[72,128]{1,0:T(1,128)}', space=vmem, size = 0x9000, scoped, tag = 'internal scratch']
  %s0 = inlined_call_operand.vmem [shape: f32[2,4,256], index: 0, kind: input, shape index: {}]
  %s1 = inlined_call_operand.vmem [shape: f32[2,1,8], index: 1, kind: input, shape index: {}]
  %s2 = inlined_call_operand.vmem [shape: f32[352,32], index: 2, kind: input, shape index: {}]
  %s3 = inlined_call_operand.vmem [shape: f32[65,128], index: 3, kind: input, shape index: {}]
  %s4 = inlined_call_operand.hbm [shape: f32[2,32,256], index: 4, kind: output, shape index: {}]
  %s5 = sld [smem:[#allocation0]]
  $region49: #{tpu_custom_call.1} parent=0
    _
  %s7 = ssub.s32 1, %s5
  %s8 = scalar_select 0, %s7, %s5
  $region1: #{tpu_custom_call.1} parent=0
    #allocation2 [shape = 'u8[65536]{0}', space=vmem, size = 0x10000, scoped, tag = 'output window, operand 0']
    #allocation3 [shape = 's32[2]{0}', space=sflag, size = 0x8, scoped, tag = 'scoped memory for tpu_custom_call.1']
    %9 = vsyncpa [#allocation3], 0
    %s10 = scalar_lea.sflag [#allocation3], 1
    %11 = vsyncpa %s10, 0
    loop: start=0, step=1, limit=4
    $region2: #{tpu_custom_call.1} parent=1 // loop_pre_header
      _
    $region3: #{tpu_custom_call.1} parent=1 // loop_header
      %s13 = sphi 0, %s17
      %p14 = scmp.ge.s32.totalorder %s13, 4
      %s23 = sphi 0, %s25
      %s26 = sphi 0, %s23
      %s27 = sphi 0, %s26
      %s43 = sphi 0, %s27
      %s49 = sphi 0, %s51
      %s52 = sphi 0, %s49
      %s53 = sphi 0, %s52
      %s69 = sphi 0, %s53
      %s73 = sphi 0, %s73
      %s75 = sphi 0, %s73
      %s76 = sphi 0, %s75
      %s90 = sphi 0, %s76
      %s94 = sphi 0, %s94
      %s96 = sphi 0, %s94
      %s97 = sphi 0, %s96
      %s111 = sphi 0, %s97
      %s117 = sphi 0, %s119
      %s120 = sphi 0, %s117
      %s121 = sphi 0, %s120
      %s137 = sphi 0, %s121
    $region4: #{tpu_custom_call.1} parent=1 // loop_header_branch
      %16 = sbr.rel (%p14) target = $region8
    $region5: #{tpu_custom_call.1} parent=1 // loop_body
      %s18 = ssub.s32 %s13, 1
      %s19 = ssub.s32 %s13, 2
      %s20 = sadd.s32 %s13, 1
      %s21 = ssub.s32 %s13, %s20
      %p22 = scmp.eq.s32.totalorder %s21, 0
      %s24 = sadd.s32 %s23, 1
      %s25 = scalar_select %p22, %s23, %s24
      %p28 = pneg %p22
      %p29 = scmp.eq.s32.totalorder %s13, 1
      %p30 = por %p28, %p29
      %p31 = scmp.ne.s32.totalorder %s23, %s26
      %p32 = scmp.eq.s32.totalorder %s13, 0
      %p33 = por %p31, %p32
      %p34 = scmp.ne.s32.totalorder %s23, %s26
      %p35 = scmp.eq.s32.totalorder %s18, 1
      %p36 = por %p34, %p35
      %p37 = scmp.ne.s32.totalorder %s26, %s27
      %p38 = scmp.eq.s32.totalorder %s18, 0
      %p39 = por %p37, %p38
      %p40 = scmp.ne.s32.totalorder %s26, %s27
      %p41 = scmp.eq.s32.totalorder %s19, 1
      %p42 = por %p40, %p41
      %p44 = scmp.ne.s32.totalorder %s27, %s43
      %p45 = scmp.eq.s32.totalorder %s19, 0
      %p46 = por %p44, %p45
      %s47 = ssub.s32 %s13, %s20
      %p48 = scmp.eq.s32.totalorder %s47, 0
      %s50 = sadd.s32 %s49, 1
      %s51 = scalar_select %p48, %s49, %s50
      %p54 = pneg %p48
      %p55 = scmp.eq.s32.totalorder %s13, 1
      %p56 = por %p54, %p55
      %p57 = scmp.ne.s32.totalorder %s49, %s52
      %p58 = scmp.eq.s32.totalorder %s13, 0
      %p59 = por %p57, %p58
      %p60 = scmp.ne.s32.totalorder %s49, %s52
      %p61 = scmp.eq.s32.totalorder %s18, 1
      %p62 = por %p60, %p61
      %p63 = scmp.ne.s32.totalorder %s52, %s53
      %p64 = scmp.eq.s32.totalorder %s18, 0
      %p65 = por %p63, %p64
      %p66 = scmp.ne.s32.totalorder %s52, %s53
      %p67 = scmp.eq.s32.totalorder %s19, 1
      %p68 = por %p66, %p67
      %p70 = scmp.ne.s32.totalorder %s53, %s69
      %p71 = scmp.eq.s32.totalorder %s19, 0
      %p72 = por %p70, %p71
      %s74 = sadd.s32 %s73, 1
      %p77 = scmp.eq.s32.totalorder %s13, 1
      %p78 = scmp.ne.s32.totalorder %s73, %s75
      %p79 = scmp.eq.s32.totalorder %s13, 0
      %p80 = por %p78, %p79
      %p81 = scmp.ne.s32.totalorder %s73, %s75
      %p82 = scmp.eq.s32.totalorder %s18, 1
      %p83 = por %p81, %p82
      %p84 = scmp.ne.s32.totalorder %s75, %s76
      %p85 = scmp.eq.s32.totalorder %s18, 0
      %p86 = por %p84, %p85
      %p87 = scmp.ne.s32.totalorder %s75, %s76
      %p88 = scmp.eq.s32.totalorder %s19, 1
      %p89 = por %p87, %p88
      %p91 = scmp.ne.s32.totalorder %s76, %s90
      %p92 = scmp.eq.s32.totalorder %s19, 0
      %p93 = por %p91, %p92
      %s95 = sadd.s32 %s94, 1
      %p98 = scmp.eq.s32.totalorder %s13, 1
      %p99 = scmp.ne.s32.totalorder %s94, %s96
      %p100 = scmp.eq.s32.totalorder %s13, 0
      %p101 = por %p99, %p100
      %p102 = scmp.ne.s32.totalorder %s94, %s96
      %p103 = scmp.eq.s32.totalorder %s18, 1
      %p104 = por %p102, %p103
      %p105 = scmp.ne.s32.totalorder %s96, %s97
      %p106 = scmp.eq.s32.totalorder %s18, 0
      %p107 = por %p105, %p106
      %p108 = scmp.ne.s32.totalorder %s96, %s97
      %p109 = scmp.eq.s32.totalorder %s19, 1
      %p110 = por %p108, %p109
      %p112 = scmp.ne.s32.totalorder %s97, %s111
      %p113 = scmp.eq.s32.totalorder %s19, 0
      %p114 = por %p112, %p113
      %s115 = ssub.s32 %s13, %s20
      %p116 = scmp.eq.s32.totalorder %s115, 0
      %s118 = sadd.s32 %s117, 1
      %s119 = scalar_select %p116, %s117, %s118
      %p122 = pneg %p116
      %p123 = scmp.eq.s32.totalorder %s13, 1
      %p124 = por %p122, %p123
      %p125 = scmp.ne.s32.totalorder %s117, %s120
      %p126 = scmp.eq.s32.totalorder %s13, 0
      %p127 = por %p125, %p126
      %p128 = scmp.ne.s32.totalorder %s117, %s120
      %p129 = scmp.eq.s32.totalorder %s18, 1
      %p130 = por %p128, %p129
      %p131 = scmp.ne.s32.totalorder %s120, %s121
      %p132 = scmp.eq.s32.totalorder %s18, 0
      %p133 = por %p131, %p132
      %p134 = scmp.ne.s32.totalorder %s120, %s121
      %p135 = scmp.eq.s32.totalorder %s19, 1
      %p136 = por %p134, %p135
      %p138 = scmp.ne.s32.totalorder %s121, %s137
      %p139 = scmp.eq.s32.totalorder %s19, 0
      %p140 = por %p138, %p139
      %p141 = scmp.le.s32.totalorder 1, %s13
      %p142 = scmp.lt.s32.totalorder %s13, 3
      %p143 = pnand %p141, %p142
      %p144 = pneg %p143
      // Predicated region
      $region9: #{tpu_custom_call.1} parent=5 // pred_check
        _
      $region10: #{tpu_custom_call.1} parent=5 // pred_check_branch
        %146 = sbr.rel (%p143) target = $region12
      $region11: #{tpu_custom_call.1} parent=5 // pred_region
        %s147 = ssub.s32 %s13, 1
        // Predicated region
        $region13: #{tpu_custom_call.1} parent=11 // pred_check
          %p148 = pneg %p86
        $region14: #{tpu_custom_call.1} parent=11 // pred_check_branch
          %150 = sbr.rel (%p148) target = $region16
        $region15: #{tpu_custom_call.1} parent=11 // pred_region
          _
        $region16: #{tpu_custom_call.1} parent=11 // pred_fallthru
          _
        // Predicated region
        $region17: #{tpu_custom_call.1} parent=11 // pred_check
          %p151 = pneg %p107
        $region18: #{tpu_custom_call.1} parent=11 // pred_check_branch
          %153 = sbr.rel (%p151) target = $region20
        $region19: #{tpu_custom_call.1} parent=11 // pred_region
          _
        $region20: #{tpu_custom_call.1} parent=11 // pred_fallthru
          _
      $region12: #{tpu_custom_call.1} parent=5 // pred_fallthru
        _
      %p154 = scmp.lt.s32.totalorder %s13, 2
      // Predicated region
      $region21: #{tpu_custom_call.1} parent=5 // pred_check
        %p155 = pneg %p154
      $region22: #{tpu_custom_call.1} parent=5 // pred_check_branch
        %157 = sbr.rel (%p155) target = $region24
      $region23: #{tpu_custom_call.1} parent=5 // pred_region
        // Predicated region
        $region25: #{tpu_custom_call.1} parent=23 // pred_check
          %p158 = pneg %p33
        $region26: #{tpu_custom_call.1} parent=23 // pred_check_branch
          %160 = sbr.rel (%p158) target = $region28
        $region27: #{tpu_custom_call.1} parent=23 // pred_region
          %p161 = scmp.lt.s32.totalorder %s13, 1
          %s162 = scalar_select %p161, %s13, 1
          %s163 = smul.addr %s162, 2
          %s164 = smul.addr %s163, 4
          %s165 = scalar_lea.vmem %s0, %s164
        $region28: #{tpu_custom_call.1} parent=23 // pred_fallthru
          _
        // Predicated region
        $region29: #{tpu_custom_call.1} parent=23 // pred_check
          %p166 = pneg %p59
        $region30: #{tpu_custom_call.1} parent=23 // pred_check_branch
          %168 = sbr.rel (%p166) target = $region32
        $region31: #{tpu_custom_call.1} parent=23 // pred_region
          %p169 = scmp.lt.s32.totalorder %s13, 1
          %s170 = scalar_select %p169, %s13, 1
          %s171 = scalar_lea.vmem %s1, %s170
        $region32: #{tpu_custom_call.1} parent=23 // pred_fallthru
          _
      $region24: #{tpu_custom_call.1} parent=5 // pred_fallthru
        _
      %p172 = scmp.le.s32.totalorder 1, %s13
      %p173 = scmp.lt.s32.totalorder %s13, 3
      %p174 = pnand %p172, %p173
      %p175 = pneg %p174
      // Predicated region
      $region33: #{tpu_custom_call.1} parent=5 // pred_check
        _
      $region34: #{tpu_custom_call.1} parent=5 // pred_check_branch
        %177 = sbr.rel (%p174) target = $region36
      $region35: #{tpu_custom_call.1} parent=5 // pred_region
        %s178 = ssub.s32 %s13, 1
        %p179 = scmp.lt.s32.totalorder %s18, 1
        %s180 = scalar_select %p179, %s18, 1
        %s181 = smul.addr %s180, 2
        %s182 = smul.addr %s181, 4
        %s183 = scalar_lea.vmem %s0, %s182
        %p184 = pneg %p39
        %p185 = pneg %p36
        %p186 = scmp.lt.s32.totalorder %s18, 1
        %s187 = scalar_select %p186, %s18, 1
        %s188 = scalar_lea.vmem %s1, %s187
        %p189 = pneg %p65
        %p190 = pneg %p62
        %p191 = pneg %p86
        %p192 = pneg %p83
        %p193 = pneg %p107
        %p194 = pneg %p104
        %p195 = pneg %p133
        %p196 = pneg %p130
        %s197 = sand.u32 %s120, 1
        %s198 = scalar_lea.sflag [#allocation3], %s197
        %s199 = sand.u32 %s120, 1
        %s200 = smul.addr %s199, 64
        %s201 = scalar_lea.vmem [#allocation2], %s200
        %p202 = scmp.lt.s32.totalorder %s18, 1
        %s203 = scalar_select %p202, %s18, 1
        %s204 = smul.addr %s203, 2
        %s205 = smul.addr %s204, 4
        %s206 = scalar_lea.vmem %s0, %s205
        %p207 = scmp.lt.s32.totalorder %s18, 1
        %s208 = scalar_select %p207, %s18, 1
        %s209 = scalar_lea.vmem %s1, %s208
        %v210 = vld [vmem:[%s206] sm:$0xff]
        %v211 = vld [vmem:[%s209] sm:$0x1]
        %v212 = vld [vmem:[%s2 + $0x40] sm:$0xff]
        %v213 = vld [vmem:[%s2 + $0x48] sm:$0xff]
        %v214 = vld [vmem:[%s2 + $0x50] sm:$0xff]
        %v215 = vld [vmem:[%s2 + $0x58] sm:$0xff]
        %v216 = vld [vmem:[%s2 + $0x60] sm:$0xff]
        %v217 = vld [vmem:[%s2 + $0x68] sm:$0xff]
        %v218 = vld [vmem:[%s2 + $0x70] sm:$0xff]
        %v219 = vld [vmem:[%s2 + $0x78] sm:$0xff]
        %v220 = vld [vmem:[%s2 + $0x80] sm:$0xff]
        %v221 = vld [vmem:[%s2 + $0x88] sm:$0xff]
        %v222 = vld [vmem:[%s2 + $0x90] sm:$0xff]
        %v223 = vld [vmem:[%s2 + $0x98] sm:$0xff]
        %v224 = vld [vmem:[%s2 + $0xa0] sm:$0xff]
        %v225 = vld [vmem:[%s2 + $0xa8] sm:$0xff]
        %v226 = vld [vmem:[%s2 + $0xb0] sm:$0xff]
        %v227 = vld [vmem:[%s2 + $0xb8] sm:$0xff]
        %v228 = vld [vmem:[%s2 + $0xc0] sm:$0xff]
        %v229 = vld [vmem:[%s2 + $0xc8] sm:$0xff]
        %v230 = vld [vmem:[%s2 + $0xd0] sm:$0xff]
        %v231 = vld [vmem:[%s2 + $0xd8] sm:$0xff]
        %v232 = vld [vmem:[%s2 + $0xe0] sm:$0xff]
        %v233 = vld [vmem:[%s2 + $0xe8] sm:$0xff]
        %v234 = vld [vmem:[%s2 + $0xf0] sm:$0xff]
        %v235 = vld [vmem:[%s2 + $0xf8] sm:$0xff]
        %v236 = vld [vmem:[%s2 + $0x100] sm:$0xff]
        %v237 = vld [vmem:[%s2 + $0x108] sm:$0xff]
        %v238 = vld [vmem:[%s2 + $0x110] sm:$0xff]
        %v239 = vld [vmem:[%s2 + $0x118] sm:$0xff]
        %v240 = vld [vmem:[%s2 + $0x120] sm:$0xff]
        %v241 = vld [vmem:[%s2 + $0x128] sm:$0xff]
        %v242 = vld [vmem:[%s2 + $0x130] sm:$0xff]
        %v243 = vld [vmem:[%s2 + $0x138] sm:$0xff]
        %v244 = vld [vmem:[%s2 + $0x140] sm:$0xff]
        %v245 = vld [vmem:[%s2 + $0x148] sm:$0xff]
        %v246 = vld [vmem:[%s2 + $0x150] sm:$0xff]
        %v247 = vld [vmem:[%s2 + $0x158] sm:$0xff]
        %v248 = vld [vmem:[%s3] sm:$0xff]
        %v249 = vld [vmem:[%s3 + $0x8] sm:$0xff]
        %v250 = vld [vmem:[%s3 + $0x10] sm:$0xff]
        %v251 = vld [vmem:[%s3 + $0x18] sm:$0xff]
        %v252 = vld [vmem:[%s3 + $0x20] sm:$0xff]
        %v253 = vld [vmem:[%s3 + $0x28] sm:$0xff]
        %v254 = vld [vmem:[%s3 + $0x30] sm:$0xff]
        %v255 = vld [vmem:[%s3 + $0x38] sm:$0xff]
        %v256 = vld [vmem:[%s3 + $0x40] sm:$0x1]
        %v258 = vperm.slane %v211, 0
        %v260 = vmul.f32 %v212, %v258
        %v261 = vmul.f32 %v213, %v258
        %v262 = vmul.f32 %v214, %v258
        %v263 = vmul.f32 %v215, %v258
        %vm264 = vcmask 64512
        %v265 = vsel %vm264, %v260, 0.0
        %266 = vadd.xlane.f32.xlu0 %v265
        %v267 = vpop.xlane.xlu0 %266
        %v268 = vsel %vm264, %v261, 0.0
        %269 = vadd.xlane.f32.xlu0 %v268
        %v270 = vpop.xlane.xlu0 %269
        %v271 = vsel %vm264, %v262, 0.0
        %272 = vadd.xlane.f32.xlu0 %v271
        %v273 = vpop.xlane.xlu0 %272
        %v274 = vsel %vm264, %v263, 0.0
        %275 = vadd.xlane.f32.xlu0 %v274
        %v276 = vpop.xlane.xlu0 %275
        %v277 = vadd.f32 %v267, %v216
        %v278 = vadd.f32 %v270, %v217
        %v279 = vadd.f32 %v273, %v218
        %v280 = vadd.f32 %v276, %v219
        %v281 = vld [vmem:[%s2] sm:$0xff]
        %v282 = vld [vmem:[%s2 + $0x8] sm:$0xff]
        %v283 = vld [vmem:[%s2 + $0x10] sm:$0xff]
        %v284 = vld [vmem:[%s2 + $0x18] sm:$0xff]
        %v285 = vld [vmem:[%s2 + $0x20] sm:$0xff]
        %v286 = vld [vmem:[%s2 + $0x28] sm:$0xff]
        %v287 = vld [vmem:[%s2 + $0x30] sm:$0xff]
        %v288 = vld [vmem:[%s2 + $0x38] sm:$0xff]
        %290 = vset.pattern.permute.xlu0 0
        %291 = vperm.xlu0 %290, %v281
        %v292 = vpop.permute.xlu0 %291
        %295 = vset.pattern.permute.xlu0 0
        %296 = vperm.xlu0 %295, %v282
        %v297 = vpop.permute.xlu0 %296
        %300 = vset.pattern.permute.xlu0 0
        %301 = vperm.xlu0 %300, %v283
        %v302 = vpop.permute.xlu0 %301
        %305 = vset.pattern.permute.xlu0 0
        %306 = vperm.xlu0 %305, %v284
        %v307 = vpop.permute.xlu0 %306
        %310 = vset.pattern.permute.xlu0 0
        %311 = vperm.xlu0 %310, %v285
        %v312 = vpop.permute.xlu0 %311
        %315 = vset.pattern.permute.xlu0 0
        %316 = vperm.xlu0 %315, %v286
        %v317 = vpop.permute.xlu0 %316
        %320 = vset.pattern.permute.xlu0 0
        %321 = vperm.xlu0 %320, %v287
        %v322 = vpop.permute.xlu0 %321
        %325 = vset.pattern.permute.xlu0 0
        %326 = vperm.xlu0 %325, %v288
        %v327 = vpop.permute.xlu0 %326
        %v330 = vperm.slane %v210, 0
        %v331 = vperm.slane %v210, 4
        %v334 = vperm.slane %v330, 0
        %v335 = vperm.slane %v331, 0
        %v336 = vmul.f32 %v292, %v334
        %v337 = vmul.f32 %v292, %v335
        %v338 = vmul.f32 %v297, %v334
        %v339 = vmul.f32 %v297, %v335
        %v340 = vmul.f32 %v302, %v334
        %v341 = vmul.f32 %v302, %v335
        %v342 = vmul.f32 %v307, %v334
        %v343 = vmul.f32 %v307, %v335
        %v344 = vmul.f32 %v312, %v334
        %v345 = vmul.f32 %v312, %v335
        %v346 = vmul.f32 %v317, %v334
        %v347 = vmul.f32 %v317, %v335
        %v348 = vmul.f32 %v322, %v334
        %v349 = vmul.f32 %v322, %v335
        %v350 = vmul.f32 %v327, %v334
        %v351 = vmul.f32 %v327, %v335
        %352 = vset.pattern.permute.xlu0 1
        %353 = vperm.xlu0 %352, %v281
        %v354 = vpop.permute.xlu0 %353
        %356 = vset.pattern.permute.xlu0 1
        %357 = vperm.xlu0 %356, %v282
        %v358 = vpop.permute.xlu0 %357
        %360 = vset.pattern.permute.xlu0 1
        %361 = vperm.xlu0 %360, %v283
        %v362 = vpop.permute.xlu0 %361
        %364 = vset.pattern.permute.xlu0 1
        %365 = vperm.xlu0 %364, %v284
        %v366 = vpop.permute.xlu0 %365
        %368 = vset.pattern.permute.xlu0 1
        %369 = vperm.xlu0 %368, %v285
        %v370 = vpop.permute.xlu0 %369
        %372 = vset.pattern.permute.xlu0 1
        %373 = vperm.xlu0 %372, %v286
        %v374 = vpop.permute.xlu0 %373
        %376 = vset.pattern.permute.xlu0 1
        %377 = vperm.xlu0 %376, %v287
        %v378 = vpop.permute.xlu0 %377
        %380 = vset.pattern.permute.xlu0 1
        %381 = vperm.xlu0 %380, %v288
        %v382 = vpop.permute.xlu0 %381
        %v384 = vperm.slane %v210, 1
        %v385 = vperm.slane %v210, 5
        %v388 = vperm.slane %v384, 1
        %v389 = vperm.slane %v385, 1
        %v390 = vmul.f32 %v354, %v388
        %v391 = vmul.f32 %v354, %v389
        %v392 = vmul.f32 %v358, %v388
        %v393 = vmul.f32 %v358, %v389
        %v394 = vmul.f32 %v362, %v388
        %v395 = vmul.f32 %v362, %v389
        %v396 = vmul.f32 %v366, %v388
        %v397 = vmul.f32 %v366, %v389
        %v398 = vmul.f32 %v370, %v388
        %v399 = vmul.f32 %v370, %v389
        %v400 = vmul.f32 %v374, %v388
        %v401 = vmul.f32 %v374, %v389
        %v402 = vmul.f32 %v378, %v388
        %v403 = vmul.f32 %v378, %v389
        %v404 = vmul.f32 %v382, %v388
        %v405 = vmul.f32 %v382, %v389
        %v406 = vadd.f32 %v336, %v390
        %v407 = vadd.f32 %v337, %v391
        %v408 = vadd.f32 %v338, %v392
        %v409 = vadd.f32 %v339, %v393
        %v410 = vadd.f32 %v340, %v394
        %v411 = vadd.f32 %v341, %v395
        %v412 = vadd.f32 %v342, %v396
        %v413 = vadd.f32 %v343, %v397
        %v414 = vadd.f32 %v344, %v398
        %v415 = vadd.f32 %v345, %v399
        %v416 = vadd.f32 %v346, %v400
        %v417 = vadd.f32 %v347, %v401
        %v418 = vadd.f32 %v348, %v402
        %v419 = vadd.f32 %v349, %v403
        %v420 = vadd.f32 %v350, %v404
        %v421 = vadd.f32 %v351, %v405
        %422 = vset.pattern.permute.xlu0 2
        %423 = vperm.xlu0 %422, %v281
        %v424 = vpop.permute.xlu0 %423
        %426 = vset.pattern.permute.xlu0 2
        %427 = vperm.xlu0 %426, %v282
        %v428 = vpop.permute.xlu0 %427
        %430 = vset.pattern.permute.xlu0 2
        %431 = vperm.xlu0 %430, %v283
        %v432 = vpop.permute.xlu0 %431
        %434 = vset.pattern.permute.xlu0 2
        %435 = vperm.xlu0 %434, %v284
        %v436 = vpop.permute.xlu0 %435
        %438 = vset.pattern.permute.xlu0 2
        %439 = vperm.xlu0 %438, %v285
        %v440 = vpop.permute.xlu0 %439
        %442 = vset.pattern.permute.xlu0 2
        %443 = vperm.xlu0 %442, %v286
        %v444 = vpop.permute.xlu0 %443
        %446 = vset.pattern.permute.xlu0 2
        %447 = vperm.xlu0 %446, %v287
        %v448 = vpop.permute.xlu0 %447
        %450 = vset.pattern.permute.xlu0 2
        %451 = vperm.xlu0 %450, %v288
        %v452 = vpop.permute.xlu0 %451
        %v454 = vperm.slane %v210, 2
        %v455 = vperm.slane %v210, 6
        %v458 = vperm.slane %v454, 2
        %v459 = vperm.slane %v455, 2
        %v460 = vmul.f32 %v424, %v458
        %v461 = vmul.f32 %v424, %v459
        %v462 = vmul.f32 %v428, %v458
        %v463 = vmul.f32 %v428, %v459
        %v464 = vmul.f32 %v432, %v458
        %v465 = vmul.f32 %v432, %v459
        %v466 = vmul.f32 %v436, %v458
        %v467 = vmul.f32 %v436, %v459
        %v468 = vmul.f32 %v440, %v458
        %v469 = vmul.f32 %v440, %v459
        %v470 = vmul.f32 %v444, %v458
        %v471 = vmul.f32 %v444, %v459
        %v472 = vmul.f32 %v448, %v458
        %v473 = vmul.f32 %v448, %v459
        %v474 = vmul.f32 %v452, %v458
        %v475 = vmul.f32 %v452, %v459
        %v476 = vadd.f32 %v406, %v460
        %v477 = vadd.f32 %v407, %v461
        %v478 = vadd.f32 %v408, %v462
        %v479 = vadd.f32 %v409, %v463
        %v480 = vadd.f32 %v410, %v464
        %v481 = vadd.f32 %v411, %v465
        %v482 = vadd.f32 %v412, %v466
        %v483 = vadd.f32 %v413, %v467
        %v484 = vadd.f32 %v414, %v468
        %v485 = vadd.f32 %v415, %v469
        %v486 = vadd.f32 %v416, %v470
        %v487 = vadd.f32 %v417, %v471
        %v488 = vadd.f32 %v418, %v472
        %v489 = vadd.f32 %v419, %v473
        %v490 = vadd.f32 %v420, %v474
        %v491 = vadd.f32 %v421, %v475
        %492 = vset.pattern.permute.xlu0 3
        %493 = vperm.xlu0 %492, %v281
        %v494 = vpop.permute.xlu0 %493
        %496 = vset.pattern.permute.xlu0 3
        %497 = vperm.xlu0 %496, %v282
        %v498 = vpop.permute.xlu0 %497
        %500 = vset.pattern.permute.xlu0 3
        %501 = vperm.xlu0 %500, %v283
        %v502 = vpop.permute.xlu0 %501
        %504 = vset.pattern.permute.xlu0 3
        %505 = vperm.xlu0 %504, %v284
        %v506 = vpop.permute.xlu0 %505
        %508 = vset.pattern.permute.xlu0 3
        %509 = vperm.xlu0 %508, %v285
        %v510 = vpop.permute.xlu0 %509
        %512 = vset.pattern.permute.xlu0 3
        %513 = vperm.xlu0 %512, %v286
        %v514 = vpop.permute.xlu0 %513
        %516 = vset.pattern.permute.xlu0 3
        %517 = vperm.xlu0 %516, %v287
        %v518 = vpop.permute.xlu0 %517
        %520 = vset.pattern.permute.xlu0 3
        %521 = vperm.xlu0 %520, %v288
        %v522 = vpop.permute.xlu0 %521
        %v524 = vperm.slane %v210, 3
        %v525 = vperm.slane %v210, 7
        %v528 = vperm.slane %v524, 3
        %v529 = vperm.slane %v525, 3
        %v530 = vmul.f32 %v494, %v528
        %v531 = vmul.f32 %v494, %v529
        %v532 = vmul.f32 %v498, %v528
        %v533 = vmul.f32 %v498, %v529
        %v534 = vmul.f32 %v502, %v528
        %v535 = vmul.f32 %v502, %v529
        %v536 = vmul.f32 %v506, %v528
        %v537 = vmul.f32 %v506, %v529
        %v538 = vmul.f32 %v510, %v528
        %v539 = vmul.f32 %v510, %v529
        %v540 = vmul.f32 %v514, %v528
        %v541 = vmul.f32 %v514, %v529
        %v542 = vmul.f32 %v518, %v528
        %v543 = vmul.f32 %v518, %v529
        %v544 = vmul.f32 %v522, %v528
        %v545 = vmul.f32 %v522, %v529
        %v546 = vadd.f32 %v476, %v530
        %v547 = vadd.f32 %v477, %v531
        %v548 = vadd.f32 %v478, %v532
        %v549 = vadd.f32 %v479, %v533
        %v550 = vadd.f32 %v480, %v534
        %v551 = vadd.f32 %v481, %v535
        %v552 = vadd.f32 %v482, %v536
        %v553 = vadd.f32 %v483, %v537
        %v554 = vadd.f32 %v484, %v538
        %v555 = vadd.f32 %v485, %v539
        %v556 = vadd.f32 %v486, %v540
        %v557 = vadd.f32 %v487, %v541
        %v558 = vadd.f32 %v488, %v542
        %v559 = vadd.f32 %v489, %v543
        %v560 = vadd.f32 %v490, %v544
        %v561 = vadd.f32 %v491, %v545
        %563 = vset.pattern.permute.xlu0 0
        %564 = vperm.xlu0 %563, %v220
        %v565 = vpop.permute.xlu0 %564
        %568 = vset.pattern.permute.xlu0 0
        %569 = vperm.xlu0 %568, %v221
        %v570 = vpop.permute.xlu0 %569
        %573 = vset.pattern.permute.xlu0 0
        %574 = vperm.xlu0 %573, %v222
        %v575 = vpop.permute.xlu0 %574
        %578 = vset.pattern.permute.xlu0 0
        %579 = vperm.xlu0 %578, %v223
        %v580 = vpop.permute.xlu0 %579
        %v582 = vadd.f32 %v546, %v565
        %v583 = vadd.f32 %v547, %v565
        %v584 = vadd.f32 %v548, %v570
        %v585 = vadd.f32 %v549, %v570
        %v586 = vadd.f32 %v550, %v575
        %v587 = vadd.f32 %v551, %v575
        %v588 = vadd.f32 %v552, %v580
        %v589 = vadd.f32 %v553, %v580
        %591 = vset.pattern.permute.xlu0 0
        %592 = vperm.xlu0 %591, %v224
        %v593 = vpop.permute.xlu0 %592
        %596 = vset.pattern.permute.xlu0 0
        %597 = vperm.xlu0 %596, %v225
        %v598 = vpop.permute.xlu0 %597
        %601 = vset.pattern.permute.xlu0 0
        %602 = vperm.xlu0 %601, %v226
        %v603 = vpop.permute.xlu0 %602
        %606 = vset.pattern.permute.xlu0 0
        %607 = vperm.xlu0 %606, %v227
        %v608 = vpop.permute.xlu0 %607
        %v610 = vadd.f32 %v554, %v593
        %v611 = vadd.f32 %v555, %v593
        %v612 = vadd.f32 %v556, %v598
        %v613 = vadd.f32 %v557, %v598
        %v614 = vadd.f32 %v558, %v603
        %v615 = vadd.f32 %v559, %v603
        %v616 = vadd.f32 %v560, %v608
        %v617 = vadd.f32 %v561, %v608
        %619 = vset.pattern.permute.xlu0 0
        %620 = vperm.xlu0 %619, %v277
        %v621 = vpop.permute.xlu0 %620
        %v623 = vmul.f32 %v621, %v582
        %v624 = vmul.f32 %v621, %v583
        %v625 = vrot.slane %v623, 4
        %v626 = vadd.f32 %v623, %v625
        %v627 = vrot.slane %v626, 2
        %v628 = vadd.f32 %v626, %v627
        %v629 = vrot.slane %v628, 1
        %v630 = vadd.f32 %v628, %v629
        %v631 = vrot.slane %v624, 4
        %v632 = vadd.f32 %v624, %v631
        %v633 = vrot.slane %v632, 2
        %v634 = vadd.f32 %v632, %v633
        %v635 = vrot.slane %v634, 1
        %v636 = vadd.f32 %v634, %v635
        %v637 = vmax.f32 %v630, %v636
        %638 = vmax.xlane.f32.xlu0 %v637
        %v639 = vpop.xlane.xlu0 %638
        %v640 = vsub.f32 %v630, %v639
        %v641 = vsub.f32 %v636, %v639
        %v642 = vmul.f32 %v640, 1.442695
        %v643 = vpow.pop %v642
        %v644 = vmul.f32 %v641, 1.442695
        %v645 = vpow.pop %v644
        %v646 = vadd.f32 %v643, %v645
        %647 = vadd.xlane.f32.xlu0 %v646
        %v648 = vpop.xlane.xlu0 %647
        %v649 = vmul.f32 %v643, %v610
        %v650 = vmul.f32 %v645, %v611
        %v651 = vadd.f32 %v649, %v650
        %652 = vadd.xlane.f32.xlu0 %v651
        %v653 = vpop.xlane.xlu0 %652
        %v654 = vrcp.pop %v648
        %v655 = vmul.f32 %v648, %v654
        %v656 = vsub.f32 1.0, %v655
        %v657 = vmul.f32 %v654, %v656
        %v658 = vadd.f32 %v654, %v657
        %vm659 = vweird.f32 %v648
        %vm660 = vweird.f32 %v654
        %vm661 = vmor %vm659, %vm660
        %v662 = vsel %vm661, %v654, %v658
        %v663 = vand.u32 2147483647, %v648
        %vm664 = vcmp.eq.f32.partialorder %v663, 8.507059e+37
        %v665 = vand.u32 %v648, 2147483648
        %v666 = vor.u32 1.1754944e-38, %v665
        %v667 = vsel %vm664, %v666, %v662
        %v668 = vmul.f32 %v653, %v667
        %670 = vset.pattern.permute.xlu0 0
        %671 = vperm.xlu0 %670, %v278
        %v672 = vpop.permute.xlu0 %671
        %v674 = vmul.f32 %v672, %v584
        %v675 = vmul.f32 %v672, %v585
        %v676 = vrot.slane %v674, 4
        %v677 = vadd.f32 %v674, %v676
        %v678 = vrot.slane %v677, 2
        %v679 = vadd.f32 %v677, %v678
        %v680 = vrot.slane %v679, 1
        %v681 = vadd.f32 %v679, %v680
        %v682 = vrot.slane %v675, 4
        %v683 = vadd.f32 %v675, %v682
        %v684 = vrot.slane %v683, 2
        %v685 = vadd.f32 %v683, %v684
        %v686 = vrot.slane %v685, 1
        %v687 = vadd.f32 %v685, %v686
        %v688 = vmax.f32 %v681, %v687
        %689 = vmax.xlane.f32.xlu0 %v688
        %v690 = vpop.xlane.xlu0 %689
        %v691 = vsub.f32 %v681, %v690
        %v692 = vsub.f32 %v687, %v690
        %v693 = vmul.f32 %v691, 1.442695
        %v694 = vpow.pop %v693
        %v695 = vmul.f32 %v692, 1.442695
        %v696 = vpow.pop %v695
        %v697 = vadd.f32 %v694, %v696
        %698 = vadd.xlane.f32.xlu0 %v697
        %v699 = vpop.xlane.xlu0 %698
        %v700 = vmul.f32 %v694, %v612
        %v701 = vmul.f32 %v696, %v613
        %v702 = vadd.f32 %v700, %v701
        %703 = vadd.xlane.f32.xlu0 %v702
        %v704 = vpop.xlane.xlu0 %703
        %v705 = vrcp.pop %v699
        %v706 = vmul.f32 %v699, %v705
        %v707 = vsub.f32 1.0, %v706
        %v708 = vmul.f32 %v705, %v707
        %v709 = vadd.f32 %v705, %v708
        %vm710 = vweird.f32 %v699
        %vm711 = vweird.f32 %v705
        %vm712 = vmor %vm710, %vm711
        %v713 = vsel %vm712, %v705, %v709
        %v714 = vand.u32 2147483647, %v699
        %vm715 = vcmp.eq.f32.partialorder %v714, 8.507059e+37
        %v716 = vand.u32 %v699, 2147483648
        %v717 = vor.u32 1.1754944e-38, %v716
        %v718 = vsel %vm715, %v717, %v713
        %v719 = vmul.f32 %v704, %v718
        %721 = vset.pattern.permute.xlu0 0
        %722 = vperm.xlu0 %721, %v279
        %v723 = vpop.permute.xlu0 %722
        %v725 = vmul.f32 %v723, %v586
        %v726 = vmul.f32 %v723, %v587
        %v727 = vrot.slane %v725, 4
        %v728 = vadd.f32 %v725, %v727
        %v729 = vrot.slane %v728, 2
        %v730 = vadd.f32 %v728, %v729
        %v731 = vrot.slane %v730, 1
        %v732 = vadd.f32 %v730, %v731
        %v733 = vrot.slane %v726, 4
        %v734 = vadd.f32 %v726, %v733
        %v735 = vrot.slane %v734, 2
        %v736 = vadd.f32 %v734, %v735
        %v737 = vrot.slane %v736, 1
        %v738 = vadd.f32 %v736, %v737
        %v739 = vmax.f32 %v732, %v738
        %740 = vmax.xlane.f32.xlu0 %v739
        %v741 = vpop.xlane.xlu0 %740
        %v742 = vsub.f32 %v732, %v741
        %v743 = vsub.f32 %v738, %v741
        %v744 = vmul.f32 %v742, 1.442695
        %v745 = vpow.pop %v744
        %v746 = vmul.f32 %v743, 1.442695
        %v747 = vpow.pop %v746
        %v748 = vadd.f32 %v745, %v747
        %749 = vadd.xlane.f32.xlu0 %v748
        %v750 = vpop.xlane.xlu0 %749
        %v751 = vmul.f32 %v745, %v614
        %v752 = vmul.f32 %v747, %v615
        %v753 = vadd.f32 %v751, %v752
        %754 = vadd.xlane.f32.xlu0 %v753
        %v755 = vpop.xlane.xlu0 %754
        %v756 = vrcp.pop %v750
        %v757 = vmul.f32 %v750, %v756
        %v758 = vsub.f32 1.0, %v757
        %v759 = vmul.f32 %v756, %v758
        %v760 = vadd.f32 %v756, %v759
        %vm761 = vweird.f32 %v750
        %vm762 = vweird.f32 %v756
        %vm763 = vmor %vm761, %vm762
        %v764 = vsel %vm763, %v756, %v760
        %v765 = vand.u32 2147483647, %v750
        %vm766 = vcmp.eq.f32.partialorder %v765, 8.507059e+37
        %v767 = vand.u32 %v750, 2147483648
        %v768 = vor.u32 1.1754944e-38, %v767
        %v769 = vsel %vm766, %v768, %v764
        %v770 = vmul.f32 %v755, %v769
        %772 = vset.pattern.permute.xlu0 0
        %773 = vperm.xlu0 %772, %v280
        %v774 = vpop.permute.xlu0 %773
        %v776 = vmul.f32 %v774, %v588
        %v777 = vmul.f32 %v774, %v589
        %v778 = vrot.slane %v776, 4
        %v779 = vadd.f32 %v776, %v778
        %v780 = vrot.slane %v779, 2
        %v781 = vadd.f32 %v779, %v780
        %v782 = vrot.slane %v781, 1
        %v783 = vadd.f32 %v781, %v782
        %v784 = vrot.slane %v777, 4
        %v785 = vadd.f32 %v777, %v784
        %v786 = vrot.slane %v785, 2
        %v787 = vadd.f32 %v785, %v786
        %v788 = vrot.slane %v787, 1
        %v789 = vadd.f32 %v787, %v788
        %v790 = vmax.f32 %v783, %v789
        %791 = vmax.xlane.f32.xlu0 %v790
        %v792 = vpop.xlane.xlu0 %791
        %v793 = vsub.f32 %v783, %v792
        %v794 = vsub.f32 %v789, %v792
        %v795 = vmul.f32 %v793, 1.442695
        %v796 = vpow.pop %v795
        %v797 = vmul.f32 %v794, 1.442695
        %v798 = vpow.pop %v797
        %v799 = vadd.f32 %v796, %v798
        %800 = vadd.xlane.f32.xlu0 %v799
        %v801 = vpop.xlane.xlu0 %800
        %v802 = vmul.f32 %v796, %v616
        %v803 = vmul.f32 %v798, %v617
        %v804 = vadd.f32 %v802, %v803
        %805 = vadd.xlane.f32.xlu0 %v804
        %v806 = vpop.xlane.xlu0 %805
        %v807 = vrcp.pop %v801
        %v808 = vmul.f32 %v801, %v807
        %v809 = vsub.f32 1.0, %v808
        %v810 = vmul.f32 %v807, %v809
        %v811 = vadd.f32 %v807, %v810
        %vm812 = vweird.f32 %v801
        %vm813 = vweird.f32 %v807
        %vm814 = vmor %vm812, %vm813
        %v815 = vsel %vm814, %v807, %v811
        %v816 = vand.u32 2147483647, %v801
        %vm817 = vcmp.eq.f32.partialorder %v816, 8.507059e+37
        %v818 = vand.u32 %v801, 2147483648
        %v819 = vor.u32 1.1754944e-38, %v818
        %v820 = vsel %vm817, %v819, %v815
        %v821 = vmul.f32 %v806, %v820
        %vm822 = vcmask 7168
        %v823 = vsel %vm822, %v668, 0.0
        %v824 = vsel %vm822, %v719, 0.0
        %v825 = vadd.f32 %v823, %v824
        %v826 = vsel %vm822, %v770, 0.0
        %v827 = vadd.f32 %v825, %v826
        %v828 = vsel %vm822, %v821, 0.0
        %v829 = vadd.f32 %v827, %v828
        %v830 = vrot.slane %v829, 4
        %v831 = vadd.f32 %v829, %v830
        %v832 = vrot.slane %v831, 2
        %v833 = vadd.f32 %v831, %v832
        %v834 = vrot.slane %v833, 1
        %v835 = vadd.f32 %v833, %v834
        %v836 = vrcp.pop 32.0
        %v837 = vmul.f32 32.0, %v836
        %v838 = vsub.f32 1.0, %v837
        %v839 = vmul.f32 %v836, %v838
        %v840 = vadd.f32 %v836, %v839
        %vm841 = vweird.f32 %v836
        %v842 = vsel %vm841, %v836, %v840
        %v843 = vmul.f32 %v835, %v842
        %v844 = vsub.f32 %v668, %v843
        %v845 = vsub.f32 %v719, %v843
        %v846 = vsub.f32 %v770, %v843
        %v847 = vsub.f32 %v821, %v843
        %v848 = vmul.f32 %v844, %v844
        %v849 = vmul.f32 %v845, %v845
        %v850 = vmul.f32 %v846, %v846
        %v851 = vmul.f32 %v847, %v847
        %v852 = vsel %vm822, %v848, 0.0
        %v853 = vsel %vm822, %v849, 0.0
        %v854 = vadd.f32 %v852, %v853
        %v855 = vsel %vm822, %v850, 0.0
        %v856 = vadd.f32 %v854, %v855
        %v857 = vsel %vm822, %v851, 0.0
        %v858 = vadd.f32 %v856, %v857
        %v859 = vrot.slane %v858, 4
        %v860 = vadd.f32 %v858, %v859
        %v861 = vrot.slane %v860, 2
        %v862 = vadd.f32 %v860, %v861
        %v863 = vrot.slane %v862, 1
        %v864 = vadd.f32 %v862, %v863
        %v865 = vmul.f32 %v864, %v842
        %v866 = vadd.f32 %v865, 1e-05
        %v867 = vrsqrt.pop %v866
        %v868 = vmul.f32 %v867, %v866
        %v869 = vmul.f32 %v868, %v867
        %v870 = vmul.f32 0.5, %v869
        %v871 = vsub.f32 1.5, %v870
        %v872 = vmul.f32 %v867, %v871
        %vm873 = vweird.f32 %v866
        %vm874 = vweird.f32 %v867
        %vm875 = vmor %vm873, %vm874
        %v876 = vsel %vm875, %v867, %v872
        %v877 = vmul.f32 %v844, %v876
        %v878 = vmul.f32 %v845, %v876
        %v879 = vmul.f32 %v846, %v876
        %v880 = vmul.f32 %v847, %v876
        %v881 = vmul.f32 %v877, %v228
        %v882 = vmul.f32 %v878, %v229
        %v883 = vmul.f32 %v879, %v230
        %v884 = vmul.f32 %v880, %v231
        %v885 = vadd.f32 %v881, %v232
        %v886 = vadd.f32 %v882, %v233
        %v887 = vadd.f32 %v883, %v234
        %v888 = vadd.f32 %v884, %v235
        %890 = vset.pattern.permute.xlu0 0
        %891 = vperm.xlu0 %890, %v885
        %v892 = vpop.permute.xlu0 %891
        %895 = vset.pattern.permute.xlu0 0
        %896 = vperm.xlu0 %895, %v886
        %v897 = vpop.permute.xlu0 %896
        %900 = vset.pattern.permute.xlu0 0
        %901 = vperm.xlu0 %900, %v887
        %v902 = vpop.permute.xlu0 %901
        %905 = vset.pattern.permute.xlu0 0
        %906 = vperm.xlu0 %905, %v888
        %v907 = vpop.permute.xlu0 %906
        %v909 = vmul.f32 %v248, %v892
        %v910 = vmul.f32 %v249, %v897
        %v911 = vmul.f32 %v250, %v902
        %v912 = vmul.f32 %v251, %v907
        %v913 = vadd.f32 %v909, %v910
        %v914 = vadd.f32 %v913, %v911
        %v915 = vadd.f32 %v914, %v912
        %v916 = vrot.slane %v915, 4
        %v917 = vadd.f32 %v915, %v916
        %v918 = vrot.slane %v917, 2
        %v919 = vadd.f32 %v917, %v918
        %v920 = vrot.slane %v919, 1
        %v921 = vadd.f32 %v919, %v920
        %v922 = vadd.f32 %v921, %v256
        %v923 = vmax.f32 %v922, 0.0
        %v924 = vperm.slane %v923, 0
        %v925 = vmul.f32 %v252, %v924
        %v926 = vmul.f32 %v253, %v924
        %v927 = vmul.f32 %v254, %v924
        %v928 = vmul.f32 %v255, %v924
        %929 = vadd.xlane.f32.xlu0 %v925
        %v930 = vpop.xlane.xlu0 %929
        %931 = vadd.xlane.f32.xlu0 %v926
        %v932 = vpop.xlane.xlu0 %931
        %933 = vadd.xlane.f32.xlu0 %v927
        %v934 = vpop.xlane.xlu0 %933
        %935 = vadd.xlane.f32.xlu0 %v928
        %v936 = vpop.xlane.xlu0 %935
        %v937 = vadd.f32 %v885, %v930
        %v938 = vadd.f32 %v886, %v932
        %v939 = vadd.f32 %v887, %v934
        %v940 = vadd.f32 %v888, %v936
        %v941 = vadd.f32 %v937, %v236
        %v942 = vadd.f32 %v938, %v237
        %v943 = vadd.f32 %v939, %v238
        %v944 = vadd.f32 %v940, %v239
        %v945 = vsel %vm822, %v941, 0.0
        %v946 = vsel %vm822, %v942, 0.0
        %v947 = vadd.f32 %v945, %v946
        %v948 = vsel %vm822, %v943, 0.0
        %v949 = vadd.f32 %v947, %v948
        %v950 = vsel %vm822, %v944, 0.0
        %v951 = vadd.f32 %v949, %v950
        %v952 = vrot.slane %v951, 4
        %v953 = vadd.f32 %v951, %v952
        %v954 = vrot.slane %v953, 2
        %v955 = vadd.f32 %v953, %v954
        %v956 = vrot.slane %v955, 1
        %v957 = vadd.f32 %v955, %v956
        %v958 = vmul.f32 %v957, %v842
        %v959 = vsub.f32 %v941, %v958
        %v960 = vsub.f32 %v942, %v958
        %v961 = vsub.f32 %v943, %v958
        %v962 = vsub.f32 %v944, %v958
        %v963 = vmul.f32 %v959, %v959
        %v964 = vmul.f32 %v960, %v960
        %v965 = vmul.f32 %v961, %v961
        %v966 = vmul.f32 %v962, %v962
        %v967 = vsel %vm822, %v963, 0.0
        %v968 = vsel %vm822, %v964, 0.0
        %v969 = vadd.f32 %v967, %v968
        %v970 = vsel %vm822, %v965, 0.0
        %v971 = vadd.f32 %v969, %v970
        %v972 = vsel %vm822, %v966, 0.0
        %v973 = vadd.f32 %v971, %v972
        %v974 = vrot.slane %v973, 4
        %v975 = vadd.f32 %v973, %v974
        %v976 = vrot.slane %v975, 2
        %v977 = vadd.f32 %v975, %v976
        %v978 = vrot.slane %v977, 1
        %v979 = vadd.f32 %v977, %v978
        %v980 = vmul.f32 %v979, %v842
        %v981 = vadd.f32 %v980, 1e-05
        %v982 = vrsqrt.pop %v981
        %v983 = vmul.f32 %v982, %v981
        %v984 = vmul.f32 %v983, %v982
        %v985 = vmul.f32 0.5, %v984
        %v986 = vsub.f32 1.5, %v985
        %v987 = vmul.f32 %v982, %v986
        %vm988 = vweird.f32 %v981
        %vm989 = vweird.f32 %v982
        %vm990 = vmor %vm988, %vm989
        %v991 = vsel %vm990, %v982, %v987
        %v992 = vmul.f32 %v959, %v991
        %v993 = vmul.f32 %v960, %v991
        %v994 = vmul.f32 %v961, %v991
        %v995 = vmul.f32 %v962, %v991
        %v996 = vmul.f32 %v992, %v240
        %v997 = vmul.f32 %v993, %v241
        %v998 = vmul.f32 %v994, %v242
        %v999 = vmul.f32 %v995, %v243
        %v1000 = vadd.f32 %v996, %v244
        %v1001 = vadd.f32 %v997, %v245
        %v1002 = vadd.f32 %v998, %v246
        %v1003 = vadd.f32 %v999, %v247
        %1005 = vset.pattern.permute.xlu0 0
        %1006 = vperm.xlu0 %1005, %v1000
        %v1007 = vpop.permute.xlu0 %1006
        %1010 = vset.pattern.permute.xlu0 0
        %1011 = vperm.xlu0 %1010, %v1001
        %v1012 = vpop.permute.xlu0 %1011
        %1015 = vset.pattern.permute.xlu0 0
        %1016 = vperm.xlu0 %1015, %v1002
        %v1017 = vpop.permute.xlu0 %1016
        %1020 = vset.pattern.permute.xlu0 0
        %1021 = vperm.xlu0 %1020, %v1003
        %v1022 = vpop.permute.xlu0 %1021
        %1024 = vst [vmem:[%s201] sm:$0xff] %v1007
        %1025 = vst [vmem:[%s201 + $0x8] sm:$0xff] %v1007
        %1026 = vst [vmem:[%s201 + $0x10] sm:$0xff] %v1012
        %1027 = vst [vmem:[%s201 + $0x18] sm:$0xff] %v1012
        %1028 = vst [vmem:[%s201 + $0x20] sm:$0xff] %v1017
        %1029 = vst [vmem:[%s201 + $0x28] sm:$0xff] %v1017
        %1030 = vst [vmem:[%s201 + $0x30] sm:$0xff] %v1022
        %1031 = vst [vmem:[%s201 + $0x38] sm:$0xff] %v1022
        %s1032 = sand.u32 %s120, 1
        %s1033 = scalar_lea.sflag [#allocation3], %s1032
        %s1034 = sand.u32 %s120, 1
        %s1035 = smul.addr %s1034, 64
        %s1036 = scalar_lea.vmem [#allocation2], %s1035
        // Predicated region
        $region37: #{tpu_custom_call.1} parent=35 // pred_check
          %p1037 = pneg %p130
        $region38: #{tpu_custom_call.1} parent=35 // pred_check_branch
          %1039 = sbr.rel (%p1037) target = $region40
        $region39: #{tpu_custom_call.1} parent=35 // pred_region
          %1041 = vsyncadd %s1033, 0
          %s1042 = smul.addr %s18, 8
          %s1043 = smul.addr %s1042, 8
          %s1044 = scalar_lea.hbm %s4, %s1043
          %s1045 = sshll.u32 %s1036, 4
          %s1046 = int_to_ptr.vmem [resolvable:$true] %s1045
          %s1047 = sshll.u32 %s1044, 4
          %s1048 = int_to_ptr.hbm [resolvable:$true] %s1047
          %1053 = dma.vmem_to_hbm [thread:$0]  %s1046, 1024, %s1048, %s1033, 256, 256, 16
        $region40: #{tpu_custom_call.1} parent=35 // pred_fallthru
          _
      $region36: #{tpu_custom_call.1} parent=5 // pred_fallthru
        _
      %p1054 = scmp.le.s32.totalorder 2, %s13
      // Predicated region
      $region41: #{tpu_custom_call.1} parent=5 // pred_check
        %p1055 = pneg %p1054
      $region42: #{tpu_custom_call.1} parent=5 // pred_check_branch
        %1057 = sbr.rel (%p1055) target = $region44
      $region43: #{tpu_custom_call.1} parent=5 // pred_region
        %s1058 = ssub.s32 %s13, 2
        // Predicated region
        $region45: #{tpu_custom_call.1} parent=43 // pred_check
          %p1059 = pneg %p136
        $region46: #{tpu_custom_call.1} parent=43 // pred_check_branch
          %1061 = sbr.rel (%p1059) target = $region48
        $region47: #{tpu_custom_call.1} parent=43 // pred_region
          %s1062 = sand.u32 %s121, 1
          %s1063 = scalar_lea.sflag [#allocation3], %s1062
          %s1064 = sand.u32 %s121, 1
          %s1065 = smul.addr %s1064, 64
          %s1066 = scalar_lea.vmem [#allocation2], %s1065
          %1068 = dma.done %s1063, 1024
        $region48: #{tpu_custom_call.1} parent=43 // pred_fallthru
          _
      $region44: #{tpu_custom_call.1} parent=5 // pred_fallthru
        _
    $region6: #{tpu_custom_call.1} parent=1 // loop_footer
      %s17 = sadd.s32 1, %s13
    $region7: #{tpu_custom_call.1} parent=1 // loop_footer_branch
      %12 = sbr.rel target = $region3
    $region8: #{tpu_custom_call.1} parent=1 // loop_exit
      _
    %1069 = vsyncpa [#allocation3], 1
    %s1070 = scalar_lea.sflag [#allocation3], 1
    %1071 = vsyncpa %s1070, 1

</llo_original>
